<compile_context>
chip_gen: v7x
topology: tpu7x:2x2x1
jax: 0.10.0
libtpu: 0.0.40
codegen_flags: <defaults>
</compile_context>

<pallas_src>
import functools

import jax
import jax.numpy as jnp
from jax import lax
from jax.experimental import pallas as pl
from jax.experimental.pallas import tpu as pltpu


# ------------------------------- kernels ------------------------------------


def _pool_attn_kernel(*refs, height: int, P: int, tile_p: int, inv_hw: float):
    """Spatial mean of sum-over-branches, then 1x1 convs + PReLU + softmax.

    refs = (x_0 .. x_{height-1},               # (BC, tile_p) activation tiles
            wdu_rows, repmat, wfc_rows, alpha, # tiny resident weights
            att_out,                           # (BC, height) output
            acc)                               # (BC, 1) f32 scratch accumulator
    """
    x_refs = refs[:height]
    wdu_rows_ref, repmat_ref, wfc_rows_ref, alpha_ref = refs[height:height + 4]
    att_ref = refs[height + 4]
    acc_ref = refs[height + 5]

    p = pl.program_id(0)

    @pl.when(p == 0)
    def _():
        acc_ref[...] = jnp.zeros_like(acc_ref)

    # feats_U tile: sum over branches, f32 accumulation.
    u = x_refs[0][...].astype(jnp.float32)
    for h in range(1, height):
        u = u + x_refs[h][...].astype(jnp.float32)

    # Mask the ragged tail of the last spatial tile (OOB input lanes are garbage).
    if P % tile_p != 0:
        lane = lax.broadcasted_iota(jnp.int32, u.shape, 1) + p * tile_p
        u = jnp.where(lane < P, u, 0.0)

    acc_ref[...] += jnp.sum(u, axis=1, keepdims=True)

    @pl.when(p == pl.num_programs(0) - 1)
    def _():
        # feats_S, one value per (b, c) sublane row.
        s = acc_ref[...] * inv_hw                                    # (BC, 1)
        # conv_du (1x1, C->d) in replicated-row form:
        #   z[b*C+c, k] = sum_c' S[b, c'] * W_du[k, c']
        # wdu_rows[r, k] = W_du[k, c(r)];  repmat = kron(I_B, ones(C, C)).
        tmp = s * wdu_rows_ref[...]                                  # (BC, d)
        z = jnp.dot(repmat_ref[...], tmp,
                    preferred_element_type=jnp.float32)              # (BC, d)
        alpha = alpha_ref[0]
        z = jnp.where(z >= 0.0, z, alpha * z)                        # PReLU
        # Per-branch 1x1 convs (d->C) as lane reductions:
        #   logit_h[b*C+c] = sum_k z[b, k] * W_fc[h][c, k]
        logits = [jnp.sum(z * wfc_rows_ref[h], axis=1, keepdims=True)
                  for h in range(height)]                            # each (BC, 1)
        att = jnp.concatenate(logits, axis=1)                        # (BC, height)
        att = att - jnp.max(att, axis=1, keepdims=True)
        att = jnp.exp(att)
        att = att * (1.0 / jnp.sum(att, axis=1, keepdims=True))      # softmax over h
        att_ref[...] = att.astype(att_ref.dtype)


def _fuse_kernel(*refs, height: int):
    """V = sum_h x[h] * att[:, h] on one lane-dense spatial tile."""
    x_refs = refs[:height]
    att_ref = refs[height]            # (BC, height), resident across the grid
    o_ref = refs[height + 1]          # (BC, tile_p)

    acc = x_refs[0][...].astype(jnp.float32) * att_ref[:, 0:1]
    for h in range(1, height):
        acc = acc + x_refs[h][...].astype(jnp.float32) * att_ref[:, h:h + 1]
    o_ref[...] = acc.astype(o_ref.dtype)


# ------------------------------- wrapper -------------------------------------


def skff_forward(inp_feats, w_du, prelu_alpha, w_fcs, *,
                 tile_p=2048, vmem_budget_bytes=12 * 1024 * 1024):
    """SKFF forward.

    inp_feats:   list of `height` arrays, each (B, C, H, W)   (PyTorch NCHW)
    w_du:        (d, C)         -- nn.Conv2d(C, d, 1, bias=False).weight squeezed
    prelu_alpha: scalar         -- nn.PReLU() weight (single shared parameter)
    w_fcs:       (height, C, d) -- stacked nn.Conv2d(d, C, 1, bias=False) weights squeezed
    """
    height = len(inp_feats)
    B, C, H, W = inp_feats[0].shape
    P = H * W
    BC = B * C
    d = w_du.shape[0]
    dtype = inp_feats[0].dtype
    itemsize = jnp.dtype(dtype).itemsize

    # Branches as separate lane-dense (BC, P) views -- no stack/pad copy.
    xs = [f.reshape(BC, P) for f in inp_feats]

    # Spatial tile: multiple of 128 lanes, budgeted against the scoped-VMEM
    # default (fuse kernel double-buffers `height` input blocks + 1 output block).
    per_lane = 2 * (height + 1) * BC * itemsize
    cap = max(128, (vmem_budget_bytes // per_lane) // 128 * 128)
    tile_p = max(128, (int(min(tile_p, cap)) // 128) * 128)
    if P <= tile_p:
        tile_p = P                      # single block == full dim (always legal)
    n_tiles = pl.cdiv(P, tile_p)

    # Tiny attention weights, pre-tiled so every kernel row is a (b, c) row.
    wdu_rows = jnp.tile(jnp.transpose(w_du).astype(jnp.float32), (B, 1))        # (BC, d)
    wfc_rows = jnp.tile(w_fcs.astype(jnp.float32), (1, B, 1))                   # (height, BC, d)
    repmat = jnp.kron(jnp.eye(B, dtype=jnp.float32),
                      jnp.ones((C, C), jnp.float32))                            # (BC, BC)
    alpha = jnp.asarray(prelu_alpha, jnp.float32).reshape(1,)

    x_spec = pl.BlockSpec((BC, tile_p), lambda p: (0, p))

    def full_spec(shape):
        return pl.BlockSpec(shape, lambda p, _s=shape: (0,) * len(_s))

    # ---- kernel 1: global-average-pool of feats_U + fused channel attention --
    att = pl.pallas_call(
        functools.partial(_pool_attn_kernel, height=height, P=P, tile_p=tile_p,
                          inv_hw=1.0 / float(P)),
        out_shape=jax.ShapeDtypeStruct((BC, height), jnp.float32),
        grid_spec=pltpu.PrefetchScalarGridSpec(
            num_scalar_prefetch=0,
            grid=(n_tiles,),
            in_specs=[x_spec] * height + [
                full_spec((BC, d)),
                full_spec((BC, BC)),
                full_spec((height, BC, d)),
                pl.BlockSpec(memory_space=pltpu.MemorySpace.SMEM),
            ],
            out_specs=full_spec((BC, height)),
            scratch_shapes=[pltpu.VMEM((BC, 1), jnp.float32)],
        ),
        compiler_params=pltpu.CompilerParams(
            dimension_semantics=("arbitrary",),     # reduction axis, output resident
        ),
        cost_estimate=pl.CostEstimate(
            flops=(height + 1) * BC * P,
            transcendentals=height * BC,
            bytes_accessed=height * BC * P * itemsize + BC * height * 4,
        ),
    )(*xs, wdu_rows, repmat, wfc_rows, alpha)

    # ---- kernel 2: V = sum_h x_h * att_h (lane-dense streaming, parallel) ----
    out = pl.pallas_call(
        functools.partial(_fuse_kernel, height=height),
        out_shape=jax.ShapeDtypeStruct((BC, P), dtype),
        grid_spec=pltpu.PrefetchScalarGridSpec(
            num_scalar_prefetch=0,
            grid=(n_tiles,),
            in_specs=[x_spec] * height + [full_spec((BC, height))],
            out_specs=pl.BlockSpec((BC, tile_p), lambda p: (0, p)),
        ),
        compiler_params=pltpu.CompilerParams(
            dimension_semantics=("parallel",),
        ),
        cost_estimate=pl.CostEstimate(
            flops=2 * height * BC * P,
            transcendentals=0,
            bytes_accessed=(height + 1) * BC * P * itemsize + BC * height * 4,
        ),
    )(*xs, att)

    return out.reshape(B, C, H, W)


# --------------------------------- main ---------------------------------------


if __name__ == "__main__":
    key = jax.random.PRNGKey(0)
    k_feats, k_du, k_fc = jax.random.split(key, 3)

    B, C, H, W = 2, 4, 16, 16
    height, reduction = 3, 8
    d = max(int(C / reduction), 4)   # matches SKFF.__init__

    inp_feats = [
        jax.random.normal(k, (B, C, H, W), dtype=jnp.float32)
        for k in jax.random.split(k_feats, height)
    ]
    # Conv2d weights (bias=False), squeezed from (out, in, 1, 1) -> (out, in)
    w_du = jax.random.normal(k_du, (d, C), dtype=jnp.float32) / jnp.sqrt(C)
    w_fcs = jax.random.normal(k_fc, (height, C, d), dtype=jnp.float32) / jnp.sqrt(d)
    prelu_alpha = jnp.float32(0.25)  # nn.PReLU() default init

    out = skff_forward(inp_feats, w_du, prelu_alpha, w_fcs)
    out = jax.block_until_ready(out)

    # ---- pure-JAX reference of SKFF.forward ---------------------------------
    xs = jnp.stack(inp_feats, axis=0)                           # (height, B, C, H, W)
    feats_u = jnp.sum(xs, axis=0)                               # (B, C, H, W)
    feats_s_ref = jnp.mean(feats_u, axis=(2, 3))                # (B, C)
    z_ref = feats_s_ref @ w_du.T                                # (B, d)
    z_ref = jnp.where(z_ref >= 0.0, z_ref, prelu_alpha * z_ref) # PReLU
    logits_ref = jnp.einsum("bd,hcd->hbc", z_ref, w_fcs)        # (height, B, C)
    att_ref = jax.nn.softmax(logits_ref, axis=0)
    ref = jnp.sum(xs * att_ref[:, :, :, None, None], axis=0)    # (B, C, H, W)

    assert out.shape == (B, C, H, W), out.shape
    max_err = float(jnp.max(jnp.abs(out - ref)))
    assert jnp.allclose(out, ref, atol=1e-4, rtol=1e-4), max_err

    print("KERNEL_OK")
</pallas_src>

<mosaic_0001>
module attributes {stable_mosaic.version = 11 : i64} {
  func.func @_pool_attn_kernel(%arg0: i32, %arg1: memref<8x256xf32, #tpu.memory_space<vmem>>, %arg2: memref<8x256xf32, #tpu.memory_space<vmem>>, %arg3: memref<8x256xf32, #tpu.memory_space<vmem>>, %arg4: memref<8x4xf32, #tpu.memory_space<vmem>>, %arg5: memref<8x8xf32, #tpu.memory_space<vmem>>, %arg6: memref<3x8x4xf32, #tpu.memory_space<vmem>>, %arg7: memref<1xf32, #tpu.memory_space<smem>>, %arg8: memref<8x3xf32, #tpu.memory_space<vmem>>, %arg9: memref<8x1xf32, #tpu.memory_space<vmem>>) attributes {dimension_semantics = [#tpu.dimension_semantics<arbitrary>], iteration_bounds = array<i64: 1>, scalar_prefetch = 0 : i64, scratch_operands = 1 : i64, tpu.core_type = #tpu.core_type<tc>, window_params = [{transform_indices = @transform_0, window_bounds = array<i64: 8, 256>}, {transform_indices = @transform_1, window_bounds = array<i64: 8, 256>}, {transform_indices = @transform_2, window_bounds = array<i64: 8, 256>}, {pipeline_mode = #tpu.pipeline_mode<synchronous>, transform_indices = @transform_3, window_bounds = array<i64: 8, 4>}, {pipeline_mode = #tpu.pipeline_mode<synchronous>, transform_indices = @transform_4, window_bounds = array<i64: 8, 8>}, {pipeline_mode = #tpu.pipeline_mode<synchronous>, transform_indices = @transform_5, window_bounds = array<i64: 3, 8, 4>}, {transform_indices = @transform_6, window_bounds = array<i64: 1>}, {pipeline_mode = #tpu.pipeline_mode<synchronous>, transform_indices = @transform_7, window_bounds = array<i64: 8, 3>}]} {
    %c0_i32 = arith.constant 0 : i32
    %0 = arith.cmpi eq, %arg0, %c0_i32 : i32
    %1 = arith.extui %0 : i1 to i32
    %c0_i32_0 = arith.constant 0 : i32
    %2 = arith.cmpi ne, %1, %c0_i32_0 : i32
    scf.if %2 {
      %cst_12 = arith.constant 0.000000e+00 : f32
      %16 = vector.broadcast %cst_12 : f32 to vector<8x1xf32>
      %c0_13 = arith.constant 0 : index
      %c0_14 = arith.constant 0 : index
      %17 = vector.load %arg9[%c0_13, %c0_14] : memref<8x1xf32, #tpu.memory_space<vmem>>, vector<8x1xf32>
      tpu.vector_store %arg9[%c0_13, %c0_14], %16 {strides = array<i32>} : memref<8x1xf32, #tpu.memory_space<vmem>>, vector<8x1xf32>,
    } else {
    }
    %c0 = arith.constant 0 : index
    %c0_1 = arith.constant 0 : index
    %3 = vector.load %arg1[%c0, %c0_1] : memref<8x256xf32, #tpu.memory_space<vmem>>, vector<8x256xf32>
    %c0_2 = arith.constant 0 : index
    %c0_3 = arith.constant 0 : index
    %4 = vector.load %arg2[%c0_2, %c0_3] : memref<8x256xf32, #tpu.memory_space<vmem>>, vector<8x256xf32>
    %5 = arith.addf %3, %4 : vector<8x256xf32>
    %c0_4 = arith.constant 0 : index
    %c0_5 = arith.constant 0 : index
    %6 = vector.load %arg3[%c0_4, %c0_5] : memref<8x256xf32, #tpu.memory_space<vmem>>, vector<8x256xf32>
    %7 = arith.addf %5, %6 : vector<8x256xf32>
    %c0_6 = arith.constant 0 : index
    %c0_7 = arith.constant 0 : index
    %8 = vector.load %arg9[%c0_6, %c0_7] : memref<8x1xf32, #tpu.memory_space<vmem>>, vector<8x1xf32>
    %cst = arith.constant dense<0.000000e+00> : vector<8xf32>
    %9 = vector.multi_reduction <add>, %7, %cst [1] : vector<8x256xf32> to vector<8xf32>
    %10 = vector.shape_cast %9 : vector<8xf32> to vector<8x1xf32>
    %11 = arith.addf %8, %10 : vector<8x1xf32>
    %c0_8 = arith.constant 0 : index
    %c0_9 = arith.constant 0 : index
    %12 = vector.load %arg9[%c0_8, %c0_9] : memref<8x1xf32, #tpu.memory_space<vmem>>, vector<8x1xf32>
    tpu.vector_store %arg9[%c0_8, %c0_9], %11 {strides = array<i32>} : memref<8x1xf32, #tpu.memory_space<vmem>>, vector<8x1xf32>,
    %c0_i32_10 = arith.constant 0 : i32
    %13 = arith.cmpi eq, %arg0, %c0_i32_10 : i32
    %14 = arith.extui %13 : i1 to i32
    %c0_i32_11 = arith.constant 0 : i32
    %15 = arith.cmpi ne, %14, %c0_i32_11 : i32
    scf.if %15 {
      %c0_12 = arith.constant 0 : index
      %c0_13 = arith.constant 0 : index
      %16 = vector.load %arg9[%c0_12, %c0_13] : memref<8x1xf32, #tpu.memory_space<vmem>>, vector<8x1xf32>
      %cst_14 = arith.constant 3.906250e-03 : f32
      %17 = vector.broadcast %cst_14 : f32 to vector<8x1xf32>
      %18 = arith.mulf %16, %17 : vector<8x1xf32>
      %c0_15 = arith.constant 0 : index
      %c0_16 = arith.constant 0 : index
      %19 = vector.load %arg4[%c0_15, %c0_16] : memref<8x4xf32, #tpu.memory_space<vmem>>, vector<8x4xf32>
      %20 = vector.broadcast %18 : vector<8x1xf32> to vector<8x4xf32>
      %21 = arith.mulf %20, %19 : vector<8x4xf32>
      %c0_17 = arith.constant 0 : index
      %c0_18 = arith.constant 0 : index
      %22 = vector.load %arg5[%c0_17, %c0_18] : memref<8x8xf32, #tpu.memory_space<vmem>>, vector<8x8xf32>
      %cst_19 = arith.constant dense<0.000000e+00> : vector<8x4xf32>
      %23 = tpu.matmul %22, %21, %cst_19 {dimension_numbers = #tpu.dot_dimension_numbers<[1], [0], [0], [1], [0, 0, 1, 1], [], []>} : vector<8x8xf32>, vector<8x4xf32>, vector<8x4xf32> -> vector<8x4xf32>
      %c0_20 = arith.constant 0 : index
      %24 = memref.load %arg7[%c0_20] : memref<1xf32, #tpu.memory_space<smem>>
      %cst_21 = arith.constant 0.000000e+00 : f32
      %25 = vector.broadcast %cst_21 : f32 to vector<8x4xf32>
      %26 = arith.cmpf oge, %23, %25 : vector<8x4xf32>
      %27 = vector.broadcast %24 : f32 to vector<8x4xf32>
      %28 = arith.mulf %27, %23 : vector<8x4xf32>
      %29 = arith.select %26, %23, %28 : vector<8x4xi1>, vector<8x4xf32>
      %c0_22 = arith.constant 0 : index
      %c0_23 = arith.constant 0 : index
      %c0_24 = arith.constant 0 : index
      %30 = vector.load %arg6[%c0_22, %c0_23, %c0_24] : memref<3x8x4xf32, #tpu.memory_space<vmem>>, vector<1x8x4xf32>
      %31 = vector.shape_cast %30 : vector<1x8x4xf32> to vector<8x4xf32>
      %32 = arith.mulf %29, %31 : vector<8x4xf32>
      %cst_25 = arith.constant dense<0.000000e+00> : vector<8xf32>
      %33 = vector.multi_reduction <add>, %32, %cst_25 [1] : vector<8x4xf32> to vector<8xf32>
      %34 = vector.shape_cast %33 : vector<8xf32> to vector<8x1xf32>
      %c1 = arith.constant 1 : index
      %c0_26 = arith.constant 0 : index
      %c0_27 = arith.constant 0 : index
      %35 = vector.load %arg6[%c1, %c0_26, %c0_27] : memref<3x8x4xf32, #tpu.memory_space<vmem>>, vector<1x8x4xf32>
      %36 = vector.shape_cast %35 : vector<1x8x4xf32> to vector<8x4xf32>
      %37 = arith.mulf %29, %36 : vector<8x4xf32>
      %cst_28 = arith.constant dense<0.000000e+00> : vector<8xf32>
      %38 = vector.multi_reduction <add>, %37, %cst_28 [1] : vector<8x4xf32> to vector<8xf32>
      %39 = vector.shape_cast %38 : vector<8xf32> to vector<8x1xf32>
      %c2 = arith.constant 2 : index
      %c0_29 = arith.constant 0 : index
      %c0_30 = arith.constant 0 : index
      %40 = vector.load %arg6[%c2, %c0_29, %c0_30] : memref<3x8x4xf32, #tpu.memory_space<vmem>>, vector<1x8x4xf32>
      %41 = vector.shape_cast %40 : vector<1x8x4xf32> to vector<8x4xf32>
      %42 = arith.mulf %29, %41 : vector<8x4xf32>
      %cst_31 = arith.constant dense<0.000000e+00> : vector<8xf32>
      %43 = vector.multi_reduction <add>, %42, %cst_31 [1] : vector<8x4xf32> to vector<8xf32>
      %44 = vector.shape_cast %43 : vector<8xf32> to vector<8x1xf32>
      %45 = tpu.concatenate %34, %39, %44 in 1 : vector<8x1xf32>, vector<8x1xf32>, vector<8x1xf32> -> vector<8x3xf32>
      %cst_32 = arith.constant dense<0xFF800000> : vector<8xf32>
      %46 = vector.multi_reduction <maximumf>, %45, %cst_32 [1] : vector<8x3xf32> to vector<8xf32>
      %47 = vector.shape_cast %46 : vector<8xf32> to vector<8x1xf32>
      %48 = vector.broadcast %47 : vector<8x1xf32> to vector<8x3xf32>
      %49 = arith.subf %45, %48 : vector<8x3xf32>
      %50 = math.exp %49 : vector<8x3xf32>
      %cst_33 = arith.constant dense<0.000000e+00> : vector<8xf32>
      %51 = vector.multi_reduction <add>, %50, %cst_33 [1] : vector<8x3xf32> to vector<8xf32>
      %52 = vector.shape_cast %51 : vector<8xf32> to vector<8x1xf32>
      %cst_34 = arith.constant 1.000000e+00 : f32
      %53 = vector.broadcast %cst_34 : f32 to vector<8x1xf32>
      %54 = arith.divf %53, %52 : vector<8x1xf32>
      %55 = vector.broadcast %54 : vector<8x1xf32> to vector<8x3xf32>
      %56 = arith.mulf %50, %55 : vector<8x3xf32>
      %c0_35 = arith.constant 0 : index
      %c0_36 = arith.constant 0 : index
      %57 = vector.load %arg8[%c0_35, %c0_36] : memref<8x3xf32, #tpu.memory_space<vmem>>, vector<8x3xf32>
      tpu.vector_store %arg8[%c0_35, %c0_36], %56 {strides = array<i32>} : memref<8x3xf32, #tpu.memory_space<vmem>>, vector<8x3xf32>,
    } else {
    }
    return
  }
  func.func @transform_0(%arg0: i32) -> (i32, i32) {
    %c0_i32 = arith.constant 0 : i32
    %c0_i32_0 = arith.constant 0 : i32
    return %c0_i32, %arg0 : i32, i32
  }
  func.func @transform_1(%arg0: i32) -> (i32, i32) {
    %c0_i32 = arith.constant 0 : i32
    %c0_i32_0 = arith.constant 0 : i32
    return %c0_i32, %arg0 : i32, i32
  }
  func.func @transform_2(%arg0: i32) -> (i32, i32) {
    %c0_i32 = arith.constant 0 : i32
    %c0_i32_0 = arith.constant 0 : i32
    return %c0_i32, %arg0 : i32, i32
  }
  func.func @transform_3(%arg0: i32) -> (i32, i32) {
    %c0_i32 = arith.constant 0 : i32
    %c0_i32_0 = arith.constant 0 : i32
    %c0_i32_1 = arith.constant 0 : i32
    return %c0_i32, %c0_i32_0 : i32, i32
  }
  func.func @transform_4(%arg0: i32) -> (i32, i32) {
    %c0_i32 = arith.constant 0 : i32
    %c0_i32_0 = arith.constant 0 : i32
    %c0_i32_1 = arith.constant 0 : i32
    return %c0_i32, %c0_i32_0 : i32, i32
  }
  func.func @transform_5(%arg0: i32) -> (i32, i32, i32) {
    %c0_i32 = arith.constant 0 : i32
    %c0_i32_0 = arith.constant 0 : i32
    %c0_i32_1 = arith.constant 0 : i32
    %c0_i32_2 = arith.constant 0 : i32
    return %c0_i32, %c0_i32_0, %c0_i32_1 : i32, i32, i32
  }
  func.func @transform_6(%arg0: i32) -> i32 {
    %c0_i32 = arith.constant 0 : i32
    %c0_i32_0 = arith.constant 0 : i32
    return %c0_i32 : i32
  }
  func.func @transform_7(%arg0: i32) -> (i32, i32) {
    %c0_i32 = arith.constant 0 : i32
    %c0_i32_0 = arith.constant 0 : i32
    %c0_i32_1 = arith.constant 0 : i32
    return %c0_i32, %c0_i32_0 : i32, i32
  }
}

</mosaic_0001>

<llo_original>
// kernel: tpu_custom_call.1
$region0: #{tpu_custom_call.1}
  #allocation0 [shape = 'u32[]', space=smem, size = 0x4, offset = 0x4, fixed_abs, tag = 'smem constant byte address 0x4 - core index']
  #allocation1 [shape = 'u32[144,128]{1,0:T(1,128)}', space=vmem, size = 0x12000, scoped, tag = 'internal scratch']
  #allocation2 [shape = 'f32[8,1]{1,0:T(8,128)}', space=vmem, size = 0x1000, scoped, tag = 'scratch operand']
  #allocation3 [shape = 'f32[1]{0:T(128)S(6)}', space=smem, size = 0x200, scoped, tag = 'scoped memory for tpu_custom_call.1']
  %s0 = inlined_call_operand.vmem [shape: f32[8,256], index: 0, kind: input, shape index: {}]
  %s1 = inlined_call_operand.vmem [shape: f32[8,256], index: 1, kind: input, shape index: {}]
  %s2 = inlined_call_operand.vmem [shape: f32[8,256], index: 2, kind: input, shape index: {}]
  %s3 = inlined_call_operand.vmem [shape: f32[8,4], index: 3, kind: input, shape index: {}]
  %s4 = inlined_call_operand.hbm [shape: f32[8,8], index: 4, kind: input, shape index: {}]
  %s5 = inlined_call_operand.vmem [shape: f32[3,8,4], index: 5, kind: input, shape index: {}]
  %s6 = inlined_call_operand.<no memory space> [shape: f32[1], index: 6, kind: input, shape index: {}]
  %s7 = inlined_call_operand.vmem [shape: f32[8,3], index: 7, kind: output, shape index: {}]
  %s8 = sld [smem:[#allocation0]]
  $region50: #{tpu_custom_call.1} parent=0
    _
  %s10 = ssub.s32 1, %s8
  %s11 = scalar_select 0, %s10, %s8
  %12 = sst [smem:[#allocation3]] %s6
  $region1: #{tpu_custom_call.1} parent=0
    #allocation4 [shape = 'u8[4096]{0}', space=vmem, size = 0x1000, scoped, tag = 'input window, operand 4, single buffered']
    #allocation5 [shape = 's32[1]{0}', space=sflag, size = 0x4, scoped, tag = 'scoped memory for tpu_custom_call.1']
    %13 = vsyncpa [#allocation5], 0
    // Predicated region
    $region2: #{tpu_custom_call.1} parent=1 // pred_check
      _
    $region3: #{tpu_custom_call.1} parent=1 // pred_check_branch
      %15 = sbr.rel (0) target = $region5
    $region4: #{tpu_custom_call.1} parent=1 // pred_region
      _
    $region5: #{tpu_custom_call.1} parent=1 // pred_fallthru
      _
    // Predicated region
    $region6: #{tpu_custom_call.1} parent=1 // pred_check
      _
    $region7: #{tpu_custom_call.1} parent=1 // pred_check_branch
      %17 = sbr.rel (0) target = $region9
    $region8: #{tpu_custom_call.1} parent=1 // pred_region
      _
    $region9: #{tpu_custom_call.1} parent=1 // pred_fallthru
      _
    // Predicated region
    $region10: #{tpu_custom_call.1} parent=1 // pred_check
      _
    $region11: #{tpu_custom_call.1} parent=1 // pred_check_branch
      %19 = sbr.rel (0) target = $region13
    $region12: #{tpu_custom_call.1} parent=1 // pred_region
      _
    $region13: #{tpu_custom_call.1} parent=1 // pred_fallthru
      _
    // Predicated region
    $region14: #{tpu_custom_call.1} parent=1 // pred_check
      _
    $region15: #{tpu_custom_call.1} parent=1 // pred_check_branch
      %21 = sbr.rel (0) target = $region17
    $region16: #{tpu_custom_call.1} parent=1 // pred_region
      _
    $region17: #{tpu_custom_call.1} parent=1 // pred_fallthru
      _
    // Predicated region
    $region18: #{tpu_custom_call.1} parent=1 // pred_check
      _
    $region19: #{tpu_custom_call.1} parent=1 // pred_check_branch
      %23 = sbr.rel (0) target = $region21
    $region20: #{tpu_custom_call.1} parent=1 // pred_region
      %s25 = ssub.s32 128, 128
      %26 = vsyncadd [#allocation5], %s25
      %s28 = sshll.u32 [#allocation4], 4
      %s29 = int_to_ptr.vmem [resolvable:$true] %s28
      %31 = dma.hbm_to_vmem [thread:$0]  %s4, 128, %s29, [#allocation5]
    $region21: #{tpu_custom_call.1} parent=1 // pred_fallthru
      _
    // Predicated region
    $region22: #{tpu_custom_call.1} parent=1 // pred_check
      _
    $region23: #{tpu_custom_call.1} parent=1 // pred_check_branch
      %33 = sbr.rel (0) target = $region25
    $region24: #{tpu_custom_call.1} parent=1 // pred_region
      _
    $region25: #{tpu_custom_call.1} parent=1 // pred_fallthru
      _
    // Predicated region
    $region26: #{tpu_custom_call.1} parent=1 // pred_check
      _
    $region27: #{tpu_custom_call.1} parent=1 // pred_check_branch
      %35 = sbr.rel (0) target = $region29
    $region28: #{tpu_custom_call.1} parent=1 // pred_region
      _
    $region29: #{tpu_custom_call.1} parent=1 // pred_fallthru
      _
    // Predicated region
    $region30: #{tpu_custom_call.1} parent=1 // pred_check
      _
    $region31: #{tpu_custom_call.1} parent=1 // pred_check_branch
      %37 = sbr.rel (0) target = $region33
    $region32: #{tpu_custom_call.1} parent=1 // pred_region
      %38 = dma.done [#allocation5], 128
    $region33: #{tpu_custom_call.1} parent=1 // pred_fallthru
      _
    %p39 = scmp.eq.s32.totalorder 0, 0
    // Predicated region
    $region34: #{tpu_custom_call.1} parent=1 // pred_check
      %p40 = pneg %p39
    $region35: #{tpu_custom_call.1} parent=1 // pred_check_branch
      %42 = sbr.rel (%p40) target = $region37
    $region36: #{tpu_custom_call.1} parent=1 // pred_region
      %vm43 = vcmask 7168
      %44 = vst.msk [vmem:[#allocation2] sm:$0xff] %vm43, 0.0
    $region37: #{tpu_custom_call.1} parent=1 // pred_fallthru
      _
    %v45 = vld [vmem:[%s0] sm:$0xff]
    %v46 = vld [vmem:[%s0 + $0x8] sm:$0xff]
    %v47 = vld [vmem:[%s1] sm:$0xff]
    %v48 = vld [vmem:[%s1 + $0x8] sm:$0xff]
    %v49 = vadd.f32 %v45, %v47
    %v50 = vadd.f32 %v46, %v48
    %v51 = vld [vmem:[%s2] sm:$0xff]
    %v52 = vld [vmem:[%s2 + $0x8] sm:$0xff]
    %v53 = vadd.f32 %v49, %v51
    %v54 = vadd.f32 %v50, %v52
    %v55 = vld [vmem:[#allocation2] sm:$0xff]
    %v56 = vadd.f32 %v53, %v54
    %57 = vadd.xlane.f32.xlu0 %v56
    %v58 = vpop.xlane.xlu0 %57
    %v59 = vadd.f32 %v55, %v58
    %vm60 = vcmask 7168
    %61 = vst.msk [vmem:[#allocation2] sm:$0xff] %vm60, %v59
    // Predicated region
    $region38: #{tpu_custom_call.1} parent=1 // pred_check
      %p62 = pneg %p39
    $region39: #{tpu_custom_call.1} parent=1 // pred_check_branch
      %64 = sbr.rel (%p62) target = $region41
    $region40: #{tpu_custom_call.1} parent=1 // pred_region
      %v65 = vld [vmem:[#allocation2] sm:$0xff]
      %v66 = vmul.f32 %v65, 0.00390625
      %v67 = vld [vmem:[%s3] sm:$0xff]
      %69 = vset.pattern.permute.xlu0 0
      %70 = vperm.xlu0 %69, %v66
      %v71 = vpop.permute.xlu0 %70
      %v73 = vmul.f32 %v71, %v67
      %v74 = vld [vmem:[#allocation4] sm:$0xff]
      %vm75 = vcmask 64512
      %v77 = vsel %vm75, %v74, 0
      %79 = vmatprep.subr.mxu0 0.0
      %80 = vmatpush1.msra.mxu0 %v73
      %81 = vmatprep.subr.mxu0 0.0
      %82 = vmatpush1.msra.mxu0 0.0
      %83 = vmatprep.subr.mxu0 0.0
      %84 = vmatpush1.msra.mxu0 0.0
      %85 = vmatprep.subr.mxu0 0.0
      %86 = vmatpush1.msra.mxu0 0.0
      %87 = vmatprep.subr.mxu0 0.0
      %88 = vmatpush1.msra.mxu0 0.0
      %89 = vmatprep.subr.mxu0 0.0
      %90 = vmatpush1.msra.mxu0 0.0
      %91 = vmatprep.subr.mxu0 0.0
      %92 = vmatpush1.msra.mxu0 0.0
      %93 = vmatprep.subr.mxu0 0.0
      %94 = vmatpush1.msra.mxu0 0.0
      %95 = vmatprep.subr.mxu0 0.0
      %96 = vmatpush1.msra.mxu0 0.0
      %97 = vmatprep.subr.mxu0 0.0
      %98 = vmatpush1.msra.mxu0 0.0
      %99 = vmatprep.subr.mxu0 0.0
      %100 = vmatpush1.msra.mxu0 0.0
      %101 = vmatprep.subr.mxu0 0.0
      %102 = vmatpush1.msra.mxu0 0.0
      %103 = vmatprep.subr.mxu0 0.0
      %104 = vmatpush1.msra.mxu0 0.0
      %105 = vmatprep.subr.mxu0 0.0
      %106 = vmatpush1.msra.mxu0 0.0
      %107 = vmatprep.subr.mxu0 0.0
      %108 = vmatpush1.msra.mxu0 0.0
      %109 = vmatprep.subr.mxu0 0.0
      %110 = vmatpush1.msra.mxu0 0.0
      %111 = vmatprep.subr.mxu0 0.0
      %112 = vmatpush1.msra.mxu0 0.0
      %113 = vmatprep.subr.mxu0 0.0
      %114 = vmatpush1.msra.mxu0 0.0
      %115 = vmatprep.subr.mxu0 0.0
      %116 = vmatpush1.msra.mxu0 0.0
      %117 = vmatprep.subr.mxu0 0.0
      %118 = vmatpush1.msra.mxu0 0.0
      %119 = vmatprep.subr.mxu0 0.0
      %120 = vmatpush1.msra.mxu0 0.0
      %121 = vmatprep.subr.mxu0 0.0
      %122 = vmatpush1.msra.mxu0 0.0
      %123 = vmatprep.subr.mxu0 0.0
      %124 = vmatpush1.msra.mxu0 0.0
      %125 = vmatprep.subr.mxu0 0.0
      %126 = vmatpush1.msra.mxu0 0.0
      %127 = vmatprep.subr.mxu0 0.0
      %128 = vmatpush1.msra.mxu0 0.0
      %129 = vmatprep.subr.mxu0 0.0
      %130 = vmatpush1.msra.mxu0 0.0
      %131 = vmatprep.subr.mxu0 0.0
      %132 = vmatpush1.msra.mxu0 0.0
      %133 = vmatprep.subr.mxu0 0.0
      %134 = vmatpush1.msra.mxu0 0.0
      %135 = vmatprep.subr.mxu0 0.0
      %136 = vmatpush1.msra.mxu0 0.0
      %137 = vmatprep.subr.mxu0 0.0
      %138 = vmatpush1.msra.mxu0 0.0
      %139 = vmatprep.subr.mxu0 0.0
      %140 = vmatpush1.msra.mxu0 0.0
      %141 = vmatprep.subr.mxu0 0.0
      %142 = vmatpush1.msra.mxu0 0.0
      %143 = vmatprep.mubr.f32.mxu0 0.0
      %144 = vmatmul.mubr.f32.gmra.mrb[0].mxu0 %v77
      %v145 = vpop.f32.mrb[0].mxu0
      %v146 = vadd.f32 0.0, %v145
      %v147 = vpop.f32.mrb[0].mxu0
      %148 = vdwg.mxu0
      %s149 = sld [smem:[#allocation3]]
      %vm150 = vcmp.ge.f32.partialorder %v146, 0.0
      %v151 = vstv %s149
      %v152 = vmul.f32 %v151, %v146
      %v153 = vsel %vm150, %v146, %v152
      %v154 = vld [vmem:[%s5] sm:$0xff]
      %v155 = vmul.f32 %v153, %v154
      %vm156 = vcmask 31744
      %v157 = vsel %vm156, %v155, 0.0
      %158 = vadd.xlane.f32.xlu0 %v157
      %v159 = vpop.xlane.xlu0 %158
      %s160 = scalar_lea.vmem %s5, 8
      %v161 = vld [vmem:[%s160] sm:$0xff]
      %v162 = vmul.f32 %v153, %v161
      %v163 = vsel %vm156, %v162, 0.0
      %164 = vadd.xlane.f32.xlu0 %v163
      %v165 = vpop.xlane.xlu0 %164
      %s166 = scalar_lea.vmem %s5, 16
      %v167 = vld [vmem:[%s166] sm:$0xff]
      %v168 = vmul.f32 %v153, %v167
      %v169 = vsel %vm156, %v168, 0.0
      %170 = vadd.xlane.f32.xlu0 %v169
      %v171 = vpop.xlane.xlu0 %170
      %v172 = vsel %vm60, %v159, %v165
      %vm173 = vcmask 15360
      %v174 = vsel %vm173, %v172, %v171
      %vm175 = vcmask 23552
      %v176 = vsel %vm175, %v174, -inf
      %177 = vmax.xlane.f32.xlu0 %v176
      %v178 = vpop.xlane.xlu0 %177
      %v179 = vsub.f32 %v174, %v178
      %v180 = vmul.f32 %v179, 1.442695
      %v181 = vpow.pop %v180
      %v182 = vsel %vm175, %v181, 0.0
      %183 = vadd.xlane.f32.xlu0 %v182
      %v184 = vpop.xlane.xlu0 %183
      %v185 = vrcp.pop %v184
      %v186 = vmul.f32 1.0, %v185
      %v187 = vmul.f32 %v181, %v186
      %188 = vst.msk [vmem:[%s7] sm:$0xff] %vm175, %v187
    $region41: #{tpu_custom_call.1} parent=1 // pred_fallthru
      _
    // Predicated region
    $region42: #{tpu_custom_call.1} parent=1 // pred_check
      _
    $region43: #{tpu_custom_call.1} parent=1 // pred_check_branch
      %190 = sbr.rel (0) target = $region45
    $region44: #{tpu_custom_call.1} parent=1 // pred_region
      _
    $region45: #{tpu_custom_call.1} parent=1 // pred_fallthru
      _
    // Predicated region
    $region46: #{tpu_custom_call.1} parent=1 // pred_check
      _
    $region47: #{tpu_custom_call.1} parent=1 // pred_check_branch
      %192 = sbr.rel (0) target = $region49
    $region48: #{tpu_custom_call.1} parent=1 // pred_region
      _
    $region49: #{tpu_custom_call.1} parent=1 // pred_fallthru
      _
    %193 = vsyncpa [#allocation5], 1

</llo_original>
